<compile_context>
chip_gen: v5e
topology: v5e:2x2
jax: 0.10.0
libtpu: 0.0.40
codegen_flags: <defaults>
</compile_context>

<pallas_src>
import jax
import jax.numpy as jnp
from jax.experimental import pallas as pl
from jax.experimental.pallas import tpu as pltpu


def _round_up(x, m):
    return (x + m - 1) // m * m


def _cls_kernel_vpu(x_ref, w_ref, o_ref):
    # x_ref: (C_in, T) tile, spatial axis on lanes.
    # w_ref: (num_class, C_in) gamma-folded weight (resident across the grid).
    # o_ref: (num_class, T) output tile (lane-dense stores).
    x = x_ref[...]
    w = w_ref[...]
    c_in = x.shape[0]
    # Tiny contraction: unrolled broadcast-FMA on full (num_class, T) vregs.
    acc = w[:, 0:1] * x[0:1, :]
    for c in range(1, c_in):
        acc = acc + w[:, c : c + 1] * x[c : c + 1, :]
    o_ref[...] = acc.astype(o_ref.dtype)


def _cls_kernel_mxu(x_ref, w_ref, o_ref):
    # Fallback for larger channel counts: contract C_in on the MXU.
    out = jax.lax.dot_general(
        w_ref[...],
        x_ref[...],
        dimension_numbers=(((1,), (0,)), ((), ())),
        preferred_element_type=jnp.float32,
    )
    o_ref[...] = out.astype(o_ref.dtype)


def linear_classifier_forward(x_nchw, weight_oihw, gamma, *, max_lane_tile=8192):
    """CSSR LinearClassifier forward: (1x1 conv, no bias) * gamma.

    x_nchw:      [N, C_in, H, W]
    weight_oihw: [num_class, C_in, 1, 1]
    gamma:       python or traced scalar
    """
    N, C_in, H, W = x_nchw.shape
    num_class = weight_oihw.shape[0]
    HW = H * W
    dtype = x_nchw.dtype
    itemsize = jnp.dtype(dtype).itemsize

    # Fold gamma into the tiny weight once (O(num_class*C_in)); traced-safe.
    w = (weight_oihw.reshape(num_class, C_in)
         * jnp.asarray(gamma, weight_oihw.dtype)).astype(dtype)

    # NCHW consumed directly; reshape is free (contiguous), no transposes.
    x = x_nchw.reshape(N, C_in, HW)

    # Lane tile: multiple of 128, as big as fits a conservative VMEM budget
    # (double-buffered input + output) so it also fits v7x's smaller VMEM.
    vmem_budget = 24 * 1024 * 1024
    bytes_per_lane = 2 * itemsize * (C_in + num_class)
    t_vmem = max(128, (vmem_budget // bytes_per_lane) // 128 * 128)
    T = max(128, min(max_lane_tile, t_vmem, _round_up(HW, 128)))

    HW_pad = _round_up(HW, T)
    if HW_pad != HW:
        x = jnp.pad(x, ((0, 0), (0, 0), (0, HW_pad - HW)))

    grid = (N, HW_pad // T)
    kernel = _cls_kernel_vpu if max(C_in, num_class) <= 64 else _cls_kernel_mxu

    out = pl.pallas_call(
        kernel,
        out_shape=jax.ShapeDtypeStruct((N, num_class, HW_pad), dtype),
        grid_spec=pltpu.PrefetchScalarGridSpec(
            num_scalar_prefetch=0,
            grid=grid,
            in_specs=[
                # Batch dim squeezed; large spatial tile on the lane axis.
                pl.BlockSpec((None, C_in, T), lambda n, t: (n, 0, t)),
                # Tiny resident weight (constant index_map across the grid).
                pl.BlockSpec((num_class, C_in), lambda n, t: (0, 0)),
            ],
            out_specs=pl.BlockSpec((None, num_class, T), lambda n, t: (n, 0, t)),
        ),
        compiler_params=pltpu.CompilerParams(
            # Both axes independent -> shard across TensorCores (v7x megacore).
            dimension_semantics=("parallel", "parallel"),
        ),
    )(x, w)

    if HW_pad != HW:
        out = out[:, :, :HW]
    return out.reshape(N, num_class, H, W)


if __name__ == "__main__":
    # Small shapes consistent with the module.
    N, C_in, H, W = 2, 4, 16, 16
    num_class = 8
    gamma = 0.1  # config['gamma']

    key = jax.random.PRNGKey(0)
    kx, kw = jax.random.split(key)

    x = jax.random.normal(kx, (N, C_in, H, W), dtype=jnp.float32)
    # nn.Conv2d(inchannels, num_class, 1, bias=False) weight shape.
    bound = 1.0 / (C_in ** 0.5)
    weight = jax.random.uniform(
        kw, (num_class, C_in, 1, 1), dtype=jnp.float32, minval=-bound, maxval=bound
    )

    out = jax.jit(linear_classifier_forward)(x, weight, gamma)
    jax.block_until_ready(out)

    # Reference: 1x1 conv == channel contraction, then * gamma.
    ref = jnp.einsum(
        "nchw,oc->nohw", x, weight.reshape(num_class, C_in),
        precision=jax.lax.Precision.HIGHEST,
    ) * gamma
    assert out.shape == (N, num_class, H, W)
    assert jnp.allclose(out, ref, atol=1e-5, rtol=1e-5)

    print("KERNEL_OK")
</pallas_src>

<mosaic_0001>
module attributes {stable_mosaic.version = 11 : i64} {
  func.func @_cls_kernel_vpu(%arg0: i32, %arg1: i32, %arg2: memref<1x4x256xf32, #tpu.memory_space<vmem>>, %arg3: memref<8x4xf32, #tpu.memory_space<vmem>>, %arg4: memref<1x8x256xf32, #tpu.memory_space<vmem>>) attributes {dimension_semantics = [#tpu.dimension_semantics<parallel>, #tpu.dimension_semantics<parallel>], iteration_bounds = array<i64: 2, 1>, scalar_prefetch = 0 : i64, scratch_operands = 0 : i64, tpu.core_type = #tpu.core_type<tc>, window_params = [{transform_indices = @transform_0, window_bounds = array<i64: 1, 4, 256>}, {pipeline_mode = #tpu.pipeline_mode<synchronous>, transform_indices = @transform_1, window_bounds = array<i64: 8, 4>}, {transform_indices = @transform_2, window_bounds = array<i64: 1, 8, 256>}]} {
    %c0 = arith.constant 0 : index
    %c0_0 = arith.constant 0 : index
    %c0_1 = arith.constant 0 : index
    %0 = vector.load %arg2[%c0, %c0_0, %c0_1] : memref<1x4x256xf32, #tpu.memory_space<vmem>>, vector<1x4x256xf32>
    %1 = vector.shape_cast %0 : vector<1x4x256xf32> to vector<4x256xf32>
    %c0_2 = arith.constant 0 : index
    %c0_3 = arith.constant 0 : index
    %2 = vector.load %arg3[%c0_2, %c0_3] : memref<8x4xf32, #tpu.memory_space<vmem>>, vector<8x4xf32>
    %3 = vector.extract_strided_slice %2 {offsets = [0, 0], sizes = [8, 1], strides = [1, 1]} : vector<8x4xf32> to vector<8x1xf32>
    %4 = vector.extract_strided_slice %1 {offsets = [0, 0], sizes = [1, 256], strides = [1, 1]} : vector<4x256xf32> to vector<1x256xf32>
    %5 = vector.broadcast %3 : vector<8x1xf32> to vector<8x256xf32>
    %6 = vector.broadcast %4 : vector<1x256xf32> to vector<8x256xf32>
    %7 = arith.mulf %5, %6 : vector<8x256xf32>
    %8 = vector.extract_strided_slice %2 {offsets = [0, 1], sizes = [8, 1], strides = [1, 1]} : vector<8x4xf32> to vector<8x1xf32>
    %9 = vector.extract_strided_slice %1 {offsets = [1, 0], sizes = [1, 256], strides = [1, 1]} : vector<4x256xf32> to vector<1x256xf32>
    %10 = vector.broadcast %8 : vector<8x1xf32> to vector<8x256xf32>
    %11 = vector.broadcast %9 : vector<1x256xf32> to vector<8x256xf32>
    %12 = arith.mulf %10, %11 : vector<8x256xf32>
    %13 = arith.addf %7, %12 : vector<8x256xf32>
    %14 = vector.extract_strided_slice %2 {offsets = [0, 2], sizes = [8, 1], strides = [1, 1]} : vector<8x4xf32> to vector<8x1xf32>
    %15 = vector.extract_strided_slice %1 {offsets = [2, 0], sizes = [1, 256], strides = [1, 1]} : vector<4x256xf32> to vector<1x256xf32>
    %16 = vector.broadcast %14 : vector<8x1xf32> to vector<8x256xf32>
    %17 = vector.broadcast %15 : vector<1x256xf32> to vector<8x256xf32>
    %18 = arith.mulf %16, %17 : vector<8x256xf32>
    %19 = arith.addf %13, %18 : vector<8x256xf32>
    %20 = vector.extract_strided_slice %2 {offsets = [0, 3], sizes = [8, 1], strides = [1, 1]} : vector<8x4xf32> to vector<8x1xf32>
    %21 = vector.extract_strided_slice %1 {offsets = [3, 0], sizes = [1, 256], strides = [1, 1]} : vector<4x256xf32> to vector<1x256xf32>
    %22 = vector.broadcast %20 : vector<8x1xf32> to vector<8x256xf32>
    %23 = vector.broadcast %21 : vector<1x256xf32> to vector<8x256xf32>
    %24 = arith.mulf %22, %23 : vector<8x256xf32>
    %25 = arith.addf %19, %24 : vector<8x256xf32>
    %c0_4 = arith.constant 0 : index
    %c0_5 = arith.constant 0 : index
    %c0_6 = arith.constant 0 : index
    %26 = vector.load %arg4[%c0_4, %c0_5, %c0_6] : memref<1x8x256xf32, #tpu.memory_space<vmem>>, vector<1x8x256xf32>
    %27 = vector.shape_cast %26 : vector<1x8x256xf32> to vector<8x256xf32>
    %28 = vector.shape_cast %25 : vector<8x256xf32> to vector<1x8x256xf32>
    tpu.vector_store %arg4[%c0_4, %c0_5, %c0_6], %28 {strides = array<i32>} : memref<1x8x256xf32, #tpu.memory_space<vmem>>, vector<1x8x256xf32>,
    return
  }
  func.func @transform_0(%arg0: i32, %arg1: i32) -> (i32, i32, i32) {
    %c0_i32 = arith.constant 0 : i32
    %c0_i32_0 = arith.constant 0 : i32
    return %arg0, %c0_i32, %arg1 : i32, i32, i32
  }
  func.func @transform_1(%arg0: i32, %arg1: i32) -> (i32, i32) {
    %c0_i32 = arith.constant 0 : i32
    %c0_i32_0 = arith.constant 0 : i32
    %c0_i32_1 = arith.constant 0 : i32
    return %c0_i32, %c0_i32_0 : i32, i32
  }
  func.func @transform_2(%arg0: i32, %arg1: i32) -> (i32, i32, i32) {
    %c0_i32 = arith.constant 0 : i32
    %c0_i32_0 = arith.constant 0 : i32
    return %arg0, %c0_i32, %arg1 : i32, i32, i32
  }
}

</mosaic_0001>

<llo_original>
// kernel: linear_classifier_forward.1
$region0: #{linear_classifier_forward.1}
  #allocation0 [shape = 'u32[]', space=smem, size = 0x4, offset = 0x4, fixed_abs, tag = 'smem constant byte address 0x4 - core index']
  #allocation1 [shape = 'u32[72,128]{1,0:T(1,128)}', space=vmem, size = 0x9000, scoped, tag = 'internal scratch']
  %s0 = inlined_call_operand.vmem [shape: f32[2,4,256], index: 0, kind: input, shape index: {}]
  %s1 = inlined_call_operand.vmem [shape: f32[8,4], index: 1, kind: input, shape index: {}]
  %s2 = inlined_call_operand.vmem [shape: f32[2,8,256], index: 2, kind: output, shape index: {}]
  %s3 = sld [smem:[#allocation0]]
  $region41: #{linear_classifier_forward.1} parent=0
    _
  %s5 = ssub.s32 1, %s3
  %s6 = scalar_select 0, %s5, %s3
  loop: start=0, step=1, limit=4
  $region2: #{linear_classifier_forward.1} parent=0 // loop_pre_header
    _
  $region3: #{linear_classifier_forward.1} parent=0 // loop_header
    %s8 = sphi 0, %s12
    %p9 = scmp.ge.s32.totalorder %s8, 4
    %s15 = sphi 0, %s27
    %s16 = sphi 0, %s23
    %s17 = sphi 0, %s15
    %s18 = sphi 0, %s16
    %s19 = sphi 0, %s17
    %s20 = sphi 0, %s18
    %s32 = sphi 0, %s34
    %s35 = sphi 0, %s32
    %s36 = sphi 0, %s35
    %s52 = sphi 0, %s36
    %s56 = sphi 0, %s56
    %s58 = sphi 0, %s56
    %s59 = sphi 0, %s58
    %s73 = sphi 0, %s59
    %s81 = sphi 0, %s83
    %s84 = sphi 0, %s81
    %s85 = sphi 0, %s84
    %s101 = sphi 0, %s85
  $region4: #{linear_classifier_forward.1} parent=0 // loop_header_branch
    %11 = sbr.rel (%p9) target = $region8
  $region5: #{linear_classifier_forward.1} parent=0 // loop_body
    %s13 = ssub.s32 %s8, 1
    %s14 = ssub.s32 %s8, 2
    %s21 = sadd.s32 1, %s16
    %p22 = scmp.ge.s32.totalorder %s21, 1
    %s23 = scalar_select %p22, 0, %s21
    %s24 = sadd.s32 1, %s15
    %s25 = scalar_select %p22, %s24, %s15
    %p26 = scmp.ge.s32.totalorder %s25, 2
    %s27 = scalar_select %p26, 0, %s25
    %s28 = ssub.s32 %s15, %s27
    %s29 = ssub.s32 %s16, %s23
    %s30 = sor.u32 %s28, %s29
    %p31 = scmp.eq.s32.totalorder %s30, 0
    %s33 = sadd.s32 %s32, 1
    %s34 = scalar_select %p31, %s32, %s33
    %p37 = pneg %p31
    %p38 = scmp.eq.s32.totalorder %s8, 1
    %p39 = por %p37, %p38
    %p40 = scmp.ne.s32.totalorder %s32, %s35
    %p41 = scmp.eq.s32.totalorder %s8, 0
    %p42 = por %p40, %p41
    %p43 = scmp.ne.s32.totalorder %s32, %s35
    %p44 = scmp.eq.s32.totalorder %s13, 1
    %p45 = por %p43, %p44
    %p46 = scmp.ne.s32.totalorder %s35, %s36
    %p47 = scmp.eq.s32.totalorder %s13, 0
    %p48 = por %p46, %p47
    %p49 = scmp.ne.s32.totalorder %s35, %s36
    %p50 = scmp.eq.s32.totalorder %s14, 1
    %p51 = por %p49, %p50
    %p53 = scmp.ne.s32.totalorder %s36, %s52
    %p54 = scmp.eq.s32.totalorder %s14, 0
    %p55 = por %p53, %p54
    %s57 = sadd.s32 %s56, 1
    %p60 = scmp.eq.s32.totalorder %s8, 1
    %p61 = scmp.ne.s32.totalorder %s56, %s58
    %p62 = scmp.eq.s32.totalorder %s8, 0
    %p63 = por %p61, %p62
    %p64 = scmp.ne.s32.totalorder %s56, %s58
    %p65 = scmp.eq.s32.totalorder %s13, 1
    %p66 = por %p64, %p65
    %p67 = scmp.ne.s32.totalorder %s58, %s59
    %p68 = scmp.eq.s32.totalorder %s13, 0
    %p69 = por %p67, %p68
    %p70 = scmp.ne.s32.totalorder %s58, %s59
    %p71 = scmp.eq.s32.totalorder %s14, 1
    %p72 = por %p70, %p71
    %p74 = scmp.ne.s32.totalorder %s59, %s73
    %p75 = scmp.eq.s32.totalorder %s14, 0
    %p76 = por %p74, %p75
    %s77 = ssub.s32 %s15, %s27
    %s78 = ssub.s32 %s16, %s23
    %s79 = sor.u32 %s77, %s78
    %p80 = scmp.eq.s32.totalorder %s79, 0
    %s82 = sadd.s32 %s81, 1
    %s83 = scalar_select %p80, %s81, %s82
    %p86 = pneg %p80
    %p87 = scmp.eq.s32.totalorder %s8, 1
    %p88 = por %p86, %p87
    %p89 = scmp.ne.s32.totalorder %s81, %s84
    %p90 = scmp.eq.s32.totalorder %s8, 0
    %p91 = por %p89, %p90
    %p92 = scmp.ne.s32.totalorder %s81, %s84
    %p93 = scmp.eq.s32.totalorder %s13, 1
    %p94 = por %p92, %p93
    %p95 = scmp.ne.s32.totalorder %s84, %s85
    %p96 = scmp.eq.s32.totalorder %s13, 0
    %p97 = por %p95, %p96
    %p98 = scmp.ne.s32.totalorder %s84, %s85
    %p99 = scmp.eq.s32.totalorder %s14, 1
    %p100 = por %p98, %p99
    %p102 = scmp.ne.s32.totalorder %s85, %s101
    %p103 = scmp.eq.s32.totalorder %s14, 0
    %p104 = por %p102, %p103
    %p105 = scmp.le.s32.totalorder 1, %s8
    %p106 = scmp.lt.s32.totalorder %s8, 3
    %p107 = pnand %p105, %p106
    %p108 = pneg %p107
    // Predicated region
    $region9: #{linear_classifier_forward.1} parent=5 // pred_check
      _
    $region10: #{linear_classifier_forward.1} parent=5 // pred_check_branch
      %110 = sbr.rel (%p107) target = $region12
    $region11: #{linear_classifier_forward.1} parent=5 // pred_region
      %s111 = ssub.s32 %s8, 1
      // Predicated region
      $region13: #{linear_classifier_forward.1} parent=11 // pred_check
        %p112 = pneg %p69
      $region14: #{linear_classifier_forward.1} parent=11 // pred_check_branch
        %114 = sbr.rel (%p112) target = $region16
      $region15: #{linear_classifier_forward.1} parent=11 // pred_region
        _
      $region16: #{linear_classifier_forward.1} parent=11 // pred_fallthru
        _
    $region12: #{linear_classifier_forward.1} parent=5 // pred_fallthru
      _
    %p115 = scmp.lt.s32.totalorder %s8, 2
    // Predicated region
    $region17: #{linear_classifier_forward.1} parent=5 // pred_check
      %p116 = pneg %p115
    $region18: #{linear_classifier_forward.1} parent=5 // pred_check_branch
      %118 = sbr.rel (%p116) target = $region20
    $region19: #{linear_classifier_forward.1} parent=5 // pred_region
      // Predicated region
      $region21: #{linear_classifier_forward.1} parent=19 // pred_check
        %p119 = pneg %p42
      $region22: #{linear_classifier_forward.1} parent=19 // pred_check_branch
        %121 = sbr.rel (%p119) target = $region24
      $region23: #{linear_classifier_forward.1} parent=19 // pred_region
        %s122 = smul.u32 2, %s16
        %p123 = scmp.lt.s32.totalorder %s15, 1
        %s124 = scalar_select %p123, %s15, 1
        %p125 = scmp.lt.s32.totalorder %s122, 1
        %s126 = scalar_select %p125, %s122, 1
        %s127 = smul.addr %s124, 2
        %s128 = sadd.s32 %s126, %s127
        %s129 = smul.addr %s128, 4
        %s130 = scalar_lea.vmem %s0, %s129
        %s131 = smul.u32 2, %s16
      $region24: #{linear_classifier_forward.1} parent=19 // pred_fallthru
        _
    $region20: #{linear_classifier_forward.1} parent=5 // pred_fallthru
      _
    %p132 = scmp.le.s32.totalorder 1, %s8
    %p133 = scmp.lt.s32.totalorder %s8, 3
    %p134 = pnand %p132, %p133
    %p135 = pneg %p134
    // Predicated region
    $region25: #{linear_classifier_forward.1} parent=5 // pred_check
      _
    $region26: #{linear_classifier_forward.1} parent=5 // pred_check_branch
      %137 = sbr.rel (%p134) target = $region28
    $region27: #{linear_classifier_forward.1} parent=5 // pred_region
      %s138 = ssub.s32 %s8, 1
      %s139 = smul.u32 2, %s18
      %p140 = scmp.lt.s32.totalorder %s17, 1
      %s141 = scalar_select %p140, %s17, 1
      %p142 = scmp.lt.s32.totalorder %s139, 1
      %s143 = scalar_select %p142, %s139, 1
      %s144 = smul.addr %s141, 2
      %s145 = sadd.s32 %s143, %s144
      %s146 = smul.addr %s145, 4
      %s147 = scalar_lea.vmem %s0, %s146
      %p148 = pneg %p48
      %p149 = pneg %p45
      %p150 = pneg %p69
      %p151 = pneg %p66
      %p152 = pneg %p97
      %p153 = pneg %p94
      %s154 = smul.u32 2, %s18
      %p155 = scmp.lt.s32.totalorder %s17, 1
      %s156 = scalar_select %p155, %s17, 1
      %p157 = scmp.lt.s32.totalorder %s154, 1
      %s158 = scalar_select %p157, %s154, 1
      %s159 = smul.addr %s156, 2
      %s160 = sadd.s32 %s158, %s159
      %s161 = smul.addr %s160, 8
      %s162 = scalar_lea.vmem %s2, %s161
      %s163 = smul.u32 2, %s18
      %p164 = scmp.lt.s32.totalorder %s17, 1
      %s165 = scalar_select %p164, %s17, 1
      %p166 = scmp.lt.s32.totalorder %s163, 1
      %s167 = scalar_select %p166, %s163, 1
      %s168 = smul.addr %s165, 2
      %s169 = sadd.s32 %s167, %s168
      %s170 = smul.addr %s169, 4
      %s171 = scalar_lea.vmem %s0, %s170
      %s172 = smul.u32 2, %s18
      %s173 = smul.u32 2, %s18
      %p174 = scmp.lt.s32.totalorder %s17, 1
      %s175 = scalar_select %p174, %s17, 1
      %p176 = scmp.lt.s32.totalorder %s173, 1
      %s177 = scalar_select %p176, %s173, 1
      %s178 = smul.addr %s175, 2
      %s179 = sadd.s32 %s177, %s178
      %s180 = smul.addr %s179, 8
      %s181 = scalar_lea.vmem %s2, %s180
      %s182 = smul.u32 2, %s18
      %v183 = vld [vmem:[%s171] sm:$0xff]
      %v184 = vld [vmem:[%s1] sm:$0xff]
      %186 = vset.pattern.permute.xlu0 0
      %187 = vperm.xlu0 %186, %v184
      %v188 = vpop.permute.xlu0 %187
      %v191 = vperm.slane %v183, 0
      %v192 = vperm.slane %v183, 4
      %v195 = vperm.slane %v191, 0
      %v196 = vperm.slane %v192, 0
      %v197 = vmul.f32 %v188, %v195
      %v198 = vmul.f32 %v188, %v196
      %199 = vset.pattern.permute.xlu0 1
      %200 = vperm.xlu0 %199, %v184
      %v201 = vpop.permute.xlu0 %200
      %v203 = vperm.slane %v183, 1
      %v204 = vperm.slane %v183, 5
      %v207 = vperm.slane %v203, 1
      %v208 = vperm.slane %v204, 1
      %v209 = vmul.f32 %v201, %v207
      %v210 = vmul.f32 %v201, %v208
      %v211 = vadd.f32 %v197, %v209
      %v212 = vadd.f32 %v198, %v210
      %213 = vset.pattern.permute.xlu0 2
      %214 = vperm.xlu0 %213, %v184
      %v215 = vpop.permute.xlu0 %214
      %v217 = vperm.slane %v183, 2
      %v218 = vperm.slane %v183, 6
      %v221 = vperm.slane %v217, 2
      %v222 = vperm.slane %v218, 2
      %v223 = vmul.f32 %v215, %v221
      %v224 = vmul.f32 %v215, %v222
      %v225 = vadd.f32 %v211, %v223
      %v226 = vadd.f32 %v212, %v224
      %227 = vset.pattern.permute.xlu0 3
      %228 = vperm.xlu0 %227, %v184
      %v229 = vpop.permute.xlu0 %228
      %v231 = vperm.slane %v183, 3
      %v232 = vperm.slane %v183, 7
      %v235 = vperm.slane %v231, 3
      %v236 = vperm.slane %v232, 3
      %v237 = vmul.f32 %v229, %v235
      %v238 = vmul.f32 %v229, %v236
      %v239 = vadd.f32 %v225, %v237
      %v240 = vadd.f32 %v226, %v238
      %241 = vst [vmem:[%s181] sm:$0xff] %v239
      %242 = vst [vmem:[%s181 + $0x8] sm:$0xff] %v240
      %s243 = smul.u32 2, %s18
      %p244 = scmp.lt.s32.totalorder %s17, 1
      %s245 = scalar_select %p244, %s17, 1
      %p246 = scmp.lt.s32.totalorder %s243, 1
      %s247 = scalar_select %p246, %s243, 1
      %s248 = smul.addr %s245, 2
      %s249 = sadd.s32 %s247, %s248
      %s250 = smul.addr %s249, 8
      %s251 = scalar_lea.vmem %s2, %s250
      // Predicated region
      $region29: #{linear_classifier_forward.1} parent=27 // pred_check
        %p252 = pneg %p94
      $region30: #{linear_classifier_forward.1} parent=27 // pred_check_branch
        %254 = sbr.rel (%p252) target = $region32
      $region31: #{linear_classifier_forward.1} parent=27 // pred_region
        %s255 = smul.u32 2, %s18
      $region32: #{linear_classifier_forward.1} parent=27 // pred_fallthru
        _
    $region28: #{linear_classifier_forward.1} parent=5 // pred_fallthru
      _
    %p256 = scmp.le.s32.totalorder 2, %s8
    // Predicated region
    $region33: #{linear_classifier_forward.1} parent=5 // pred_check
      %p257 = pneg %p256
    $region34: #{linear_classifier_forward.1} parent=5 // pred_check_branch
      %259 = sbr.rel (%p257) target = $region36
    $region35: #{linear_classifier_forward.1} parent=5 // pred_region
      %s260 = ssub.s32 %s8, 2
      // Predicated region
      $region37: #{linear_classifier_forward.1} parent=35 // pred_check
        %p261 = pneg %p100
      $region38: #{linear_classifier_forward.1} parent=35 // pred_check_branch
        %263 = sbr.rel (%p261) target = $region40
      $region39: #{linear_classifier_forward.1} parent=35 // pred_region
        %s264 = smul.u32 2, %s20
        %p265 = scmp.lt.s32.totalorder %s19, 1
        %s266 = scalar_select %p265, %s19, 1
        %p267 = scmp.lt.s32.totalorder %s264, 1
        %s268 = scalar_select %p267, %s264, 1
        %s269 = smul.addr %s266, 2
        %s270 = sadd.s32 %s268, %s269
        %s271 = smul.addr %s270, 8
        %s272 = scalar_lea.vmem %s2, %s271
      $region40: #{linear_classifier_forward.1} parent=35 // pred_fallthru
        _
    $region36: #{linear_classifier_forward.1} parent=5 // pred_fallthru
      _
  $region6: #{linear_classifier_forward.1} parent=0 // loop_footer
    %s12 = sadd.s32 1, %s8
  $region7: #{linear_classifier_forward.1} parent=0 // loop_footer_branch
    %7 = sbr.rel target = $region3
  $region8: #{linear_classifier_forward.1} parent=0 // loop_exit
    _

</llo_original>
